<compile_context>
chip_gen: v7x
topology: tpu7x:2x2x1
jax: 0.10.0
libtpu: 0.0.40
codegen_flags: <defaults>
</compile_context>

<pallas_src>
import functools

import jax
import jax.numpy as jnp
from jax.experimental import pallas as pl
from jax.experimental.pallas import tpu as pltpu


def policy_net_kernel(x_ref, w1_ref, b1_ref, w2_ref, b2_ref, w3c_ref, b3_ref, o_ref):
    """One batch tile.  x_ref is (4, TB) f32 with batch mapped to the lane axis.

    fc1 (K=4) runs on the VPU as 4 broadcast multiply-adds in f32; fc2 (K=24) runs
    on the MXU with bf16 operands and f32 accumulation; fc3 (1 output feature) is a
    VPU broadcast-multiply + XLU sublane reduce feeding the EUP sigmoid.
    """
    x = x_ref[...]                                                     # (4, TB) f32
    w1 = w1_ref[...]                                                   # (24, 4) f32

    # fc1 + ReLU on the VPU (exact f32): h1[j, n] = sum_k w1[j, k] * x[k, n] + b1[j]
    h1 = (w1[:, 0:1] * x[0:1, :]
          + w1[:, 1:2] * x[1:2, :]
          + w1[:, 2:3] * x[2:3, :]
          + w1[:, 3:4] * x[3:4, :]) + b1_ref[...]                      # (24, TB)
    h1 = jnp.maximum(h1, 0.0)

    # fc2 + ReLU on the MXU: bf16 operands, f32 accumulation. (36,24)@(24,TB)->(36,TB)
    h2 = jnp.dot(w2_ref[...], h1.astype(jnp.bfloat16),
                 preferred_element_type=jnp.float32) + b2_ref[...]
    h2 = jnp.maximum(h2, 0.0)

    # fc3 (out_features == 1): VPU multiply + sublane reduce, not an N=1 matmul.
    h3 = jnp.sum(h2 * w3c_ref[...], axis=0, keepdims=True) + b3_ref[...]   # (1, TB)

    # Lane-dense (1, TB) output store.
    o_ref[...] = jax.nn.sigmoid(h3)


def _round_up(n, m):
    return -(-n // m) * m


@functools.partial(jax.jit, static_argnames=("block_b",))
def policy_net_forward_fm(xt, params, block_b=32768):
    """Forward pass, feature-major input (no wrapper-side transpose).

    xt:     (4, B) float32 observations, batch on the last (lane) axis.
    params: PyTorch-native layout — W_k: (out_features, in_features), b_k: (out_features,).
    Returns (1, B) = sigmoid(fc3(relu(fc2(relu(fc1(x)))))), lane-dense.
    """
    if block_b <= 0 or block_b % 128 != 0:
        raise ValueError(f"block_b must be a positive multiple of 128, got {block_b}")

    w1, b1, w2, b2, w3, b3 = params
    B = xt.shape[1]

    # --- grid / tile selection -------------------------------------------------
    # * at least 2 (and an even number of) steps once there are >=256 padded lanes,
    #   so ("parallel",) actually splits the batch across both v7x TensorCores.
    # * bb = round_up(ceil(B / n_steps), 128) keeps padding waste < 128 lanes/step.
    bp128 = _round_up(B, 128)
    n_steps = -(-bp128 // block_b)
    if bp128 >= 256:
        n_steps = max(n_steps, 2)
        n_steps += n_steps % 2
    bb = _round_up(-(-B // n_steps), 128)          # batch tile (lane width)
    Bp = n_steps * bb

    # Pad batch lanes up to the grid extent (single pad op; fused by XLA under jit).
    xt_p = jnp.pad(xt.astype(jnp.float32), ((0, 0), (0, Bp - B)))          # (4, Bp)

    # Kernel-side parameter layouts: biases as (out, 1) f32 columns, fc2 weight in
    # bf16 for the MXU, fc3 weight as a (36, 1) f32 column for the VPU reduce.
    w1f = w1.astype(jnp.float32)                                           # (24, 4)
    b1c = b1.reshape(-1, 1).astype(jnp.float32)                            # (24, 1)
    w2h = w2.astype(jnp.bfloat16)                                          # (36, 24)
    b2c = b2.reshape(-1, 1).astype(jnp.float32)                            # (36, 1)
    w3c = w3.reshape(-1, 1).astype(jnp.float32)                            # (36, 1)
    b3c = b3.reshape(1, 1).astype(jnp.float32)                             # (1, 1)

    # Full-shape block + constant index_map => parameter stays resident in VMEM.
    def resident(a):
        return pl.BlockSpec(a.shape, lambda i: (0, 0))

    # VMEM budget: ~1 KiB/lane covers double-buffered x/out tiles, f32 h1/h2, the
    # bf16 h1 copy and compiler temporaries, + a few MiB of slack; capped below
    # v7x's 64 MiB physical VMEM (v5e/v6e have 128 MiB).
    vmem_limit = min(bb * 1024 + (4 << 20), 56 << 20)

    out = pl.pallas_call(
        policy_net_kernel,
        out_shape=jax.ShapeDtypeStruct((1, Bp), jnp.float32),
        grid=(n_steps,),
        in_specs=[
            pl.BlockSpec((4, bb), lambda i: (0, i)),     # x tiles stream over the grid
            resident(w1f), resident(b1c),
            resident(w2h), resident(b2c),
            resident(w3c), resident(b3c),
        ],
        out_specs=pl.BlockSpec((1, bb), lambda i: (0, i)),
        compiler_params=pltpu.CompilerParams(
            dimension_semantics=("parallel",),           # megacore sharding on v7x
            vmem_limit_bytes=vmem_limit,
        ),
    )(xt_p, w1f, b1c, w2h, b2c, w3c, b3c)

    return out[:, :B]                                                       # (1, B)


@functools.partial(jax.jit, static_argnames=("block_b",))
def policy_net_forward(x, params, block_b=32768):
    """PyTorch-layout forward: x is (B, 4); returns (B, 1)."""
    B = x.shape[0]
    out_fm = policy_net_forward_fm(x.T, params, block_b=block_b)            # (1, B)
    return out_fm.reshape(B, 1)


def init_params(key):
    """PyTorch nn.Linear default init: U(-1/sqrt(fan_in), 1/sqrt(fan_in)).
    Weights stored PyTorch-native as (out_features, in_features); biases as (out_features,)."""
    dims = [(24, 4), (36, 24), (1, 36)]
    params = []
    keys = jax.random.split(key, 2 * len(dims))
    for i, (fan_out, fan_in) in enumerate(dims):
        bound = 1.0 / jnp.sqrt(float(fan_in))
        w = jax.random.uniform(keys[2 * i], (fan_out, fan_in), jnp.float32,
                               minval=-bound, maxval=bound)
        b = jax.random.uniform(keys[2 * i + 1], (fan_out,), jnp.float32,
                               minval=-bound, maxval=bound)
        params += [w, b]
    return tuple(params)


def reference_forward(x, params):
    """Plain-JAX reference with PyTorch semantics (x @ W.T + b), full f32."""
    w1, b1, w2, b2, w3, b3 = params
    h1 = jnp.maximum(x @ w1.T + b1, 0.0)
    h2 = jnp.maximum(h1 @ w2.T + b2, 0.0)
    return jax.nn.sigmoid(h2 @ w3.T + b3)


if __name__ == "__main__":
    key = jax.random.PRNGKey(0)
    pkey, xkey, xkey2 = jax.random.split(key, 3)

    params = init_params(pkey)

    # Tolerance is relaxed vs. a pure-f32 kernel because fc2 uses bf16 MXU operands
    # (f32 accumulation); observed error is ~1e-3 on sigmoid outputs.
    ATOL = RTOL = 2e-2

    # Small CartPole-style batch: 8 observations of 4 features (single 128-lane tile).
    x = jax.random.normal(xkey, (8, 4), jnp.float32)
    out = jax.block_until_ready(policy_net_forward(x, params))
    ref = reference_forward(x, params)
    assert out.shape == (8, 1)
    assert jnp.allclose(out, ref, atol=ATOL, rtol=RTOL), float(jnp.max(jnp.abs(out - ref)))

    # Multi-step grid path: B = 300 with 128-lane tiles -> 4 grid steps + <128-lane padding.
    xb = jax.random.normal(xkey2, (300, 4), jnp.float32)
    outb = jax.block_until_ready(policy_net_forward(xb, params, block_b=128))
    refb = reference_forward(xb, params)
    assert outb.shape == (300, 1)
    assert jnp.allclose(outb, refb, atol=ATOL, rtol=RTOL), float(jnp.max(jnp.abs(outb - refb)))

    # Feature-major entry (producer emits (4, B): no wrapper transpose) with default tile.
    out_fm = jax.block_until_ready(policy_net_forward_fm(xb.T, params))
    assert out_fm.shape == (1, 300)
    assert jnp.allclose(out_fm, refb.T, atol=ATOL, rtol=RTOL)

    print("KERNEL_OK")
</pallas_src>

<mosaic_0001>
module attributes {stable_mosaic.version = 11 : i64} {
  func.func @policy_net_kernel(%arg0: i32, %arg1: memref<4x128xf32, #tpu.memory_space<vmem>>, %arg2: memref<24x4xf32, #tpu.memory_space<vmem>>, %arg3: memref<24x1xf32, #tpu.memory_space<vmem>>, %arg4: memref<36x24xbf16, #tpu.memory_space<vmem>>, %arg5: memref<36x1xf32, #tpu.memory_space<vmem>>, %arg6: memref<36x1xf32, #tpu.memory_space<vmem>>, %arg7: memref<1x1xf32, #tpu.memory_space<vmem>>, %arg8: memref<1x128xf32, #tpu.memory_space<vmem>>) attributes {dimension_semantics = [#tpu.dimension_semantics<parallel>], iteration_bounds = array<i64: 1>, scalar_prefetch = 0 : i64, scratch_operands = 0 : i64, tpu.core_type = #tpu.core_type<tc>, window_params = [{transform_indices = @transform_0, window_bounds = array<i64: 4, 128>}, {pipeline_mode = #tpu.pipeline_mode<synchronous>, transform_indices = @transform_1, window_bounds = array<i64: 24, 4>}, {pipeline_mode = #tpu.pipeline_mode<synchronous>, transform_indices = @transform_2, window_bounds = array<i64: 24, 1>}, {pipeline_mode = #tpu.pipeline_mode<synchronous>, transform_indices = @transform_3, window_bounds = array<i64: 36, 24>}, {pipeline_mode = #tpu.pipeline_mode<synchronous>, transform_indices = @transform_4, window_bounds = array<i64: 36, 1>}, {pipeline_mode = #tpu.pipeline_mode<synchronous>, transform_indices = @transform_5, window_bounds = array<i64: 36, 1>}, {pipeline_mode = #tpu.pipeline_mode<synchronous>, transform_indices = @transform_6, window_bounds = array<i64: 1, 1>}, {transform_indices = @transform_7, window_bounds = array<i64: 1, 128>}]} {
    %c0 = arith.constant 0 : index
    %c0_0 = arith.constant 0 : index
    %0 = vector.load %arg1[%c0, %c0_0] : memref<4x128xf32, #tpu.memory_space<vmem>>, vector<4x128xf32>
    %c0_1 = arith.constant 0 : index
    %c0_2 = arith.constant 0 : index
    %1 = vector.load %arg2[%c0_1, %c0_2] : memref<24x4xf32, #tpu.memory_space<vmem>>, vector<24x4xf32>
    %2 = vector.extract_strided_slice %1 {offsets = [0, 0], sizes = [24, 1], strides = [1, 1]} : vector<24x4xf32> to vector<24x1xf32>
    %3 = vector.extract_strided_slice %0 {offsets = [0, 0], sizes = [1, 128], strides = [1, 1]} : vector<4x128xf32> to vector<1x128xf32>
    %4 = vector.broadcast %2 : vector<24x1xf32> to vector<24x128xf32>
    %5 = vector.broadcast %3 : vector<1x128xf32> to vector<24x128xf32>
    %6 = arith.mulf %4, %5 : vector<24x128xf32>
    %7 = vector.extract_strided_slice %1 {offsets = [0, 1], sizes = [24, 1], strides = [1, 1]} : vector<24x4xf32> to vector<24x1xf32>
    %8 = vector.extract_strided_slice %0 {offsets = [1, 0], sizes = [1, 128], strides = [1, 1]} : vector<4x128xf32> to vector<1x128xf32>
    %9 = vector.broadcast %7 : vector<24x1xf32> to vector<24x128xf32>
    %10 = vector.broadcast %8 : vector<1x128xf32> to vector<24x128xf32>
    %11 = arith.mulf %9, %10 : vector<24x128xf32>
    %12 = arith.addf %6, %11 : vector<24x128xf32>
    %13 = vector.extract_strided_slice %1 {offsets = [0, 2], sizes = [24, 1], strides = [1, 1]} : vector<24x4xf32> to vector<24x1xf32>
    %14 = vector.extract_strided_slice %0 {offsets = [2, 0], sizes = [1, 128], strides = [1, 1]} : vector<4x128xf32> to vector<1x128xf32>
    %15 = vector.broadcast %13 : vector<24x1xf32> to vector<24x128xf32>
    %16 = vector.broadcast %14 : vector<1x128xf32> to vector<24x128xf32>
    %17 = arith.mulf %15, %16 : vector<24x128xf32>
    %18 = arith.addf %12, %17 : vector<24x128xf32>
    %19 = vector.extract_strided_slice %1 {offsets = [0, 3], sizes = [24, 1], strides = [1, 1]} : vector<24x4xf32> to vector<24x1xf32>
    %20 = vector.extract_strided_slice %0 {offsets = [3, 0], sizes = [1, 128], strides = [1, 1]} : vector<4x128xf32> to vector<1x128xf32>
    %21 = vector.broadcast %19 : vector<24x1xf32> to vector<24x128xf32>
    %22 = vector.broadcast %20 : vector<1x128xf32> to vector<24x128xf32>
    %23 = arith.mulf %21, %22 : vector<24x128xf32>
    %24 = arith.addf %18, %23 : vector<24x128xf32>
    %c0_3 = arith.constant 0 : index
    %c0_4 = arith.constant 0 : index
    %25 = vector.load %arg3[%c0_3, %c0_4] : memref<24x1xf32, #tpu.memory_space<vmem>>, vector<24x1xf32>
    %26 = vector.broadcast %25 : vector<24x1xf32> to vector<24x128xf32>
    %27 = arith.addf %24, %26 : vector<24x128xf32>
    %cst = arith.constant 0.000000e+00 : f32
    %28 = vector.broadcast %cst : f32 to vector<24x128xf32>
    %29 = arith.maximumf %27, %28 : vector<24x128xf32>
    %c0_5 = arith.constant 0 : index
    %c0_6 = arith.constant 0 : index
    %30 = vector.load %arg4[%c0_5, %c0_6] : memref<36x24xbf16, #tpu.memory_space<vmem>>, vector<36x24xbf16>
    %31 = arith.truncf %29 : vector<24x128xf32> to vector<24x128xbf16>
    %cst_7 = arith.constant dense<0.000000e+00> : vector<36x128xf32>
    %32 = tpu.matmul %30, %31, %cst_7 {dimension_numbers = #tpu.dot_dimension_numbers<[1], [0], [0], [1], [0, 0, 1, 1], [], []>} : vector<36x24xbf16>, vector<24x128xbf16>, vector<36x128xf32> -> vector<36x128xf32>
    %c0_8 = arith.constant 0 : index
    %c0_9 = arith.constant 0 : index
    %33 = vector.load %arg5[%c0_8, %c0_9] : memref<36x1xf32, #tpu.memory_space<vmem>>, vector<36x1xf32>
    %34 = vector.broadcast %33 : vector<36x1xf32> to vector<36x128xf32>
    %35 = arith.addf %32, %34 : vector<36x128xf32>
    %cst_10 = arith.constant 0.000000e+00 : f32
    %36 = vector.broadcast %cst_10 : f32 to vector<36x128xf32>
    %37 = arith.maximumf %35, %36 : vector<36x128xf32>
    %c0_11 = arith.constant 0 : index
    %c0_12 = arith.constant 0 : index
    %38 = vector.load %arg6[%c0_11, %c0_12] : memref<36x1xf32, #tpu.memory_space<vmem>>, vector<36x1xf32>
    %39 = vector.broadcast %38 : vector<36x1xf32> to vector<36x128xf32>
    %40 = arith.mulf %37, %39 : vector<36x128xf32>
    %cst_13 = arith.constant dense<0.000000e+00> : vector<128xf32>
    %41 = vector.multi_reduction <add>, %40, %cst_13 [0] : vector<36x128xf32> to vector<128xf32>
    %42 = vector.shape_cast %41 : vector<128xf32> to vector<1x128xf32>
    %c0_14 = arith.constant 0 : index
    %c0_15 = arith.constant 0 : index
    %43 = vector.load %arg7[%c0_14, %c0_15] : memref<1x1xf32, #tpu.memory_space<vmem>>, vector<1x1xf32>
    %44 = vector.broadcast %43 : vector<1x1xf32> to vector<1x128xf32>
    %45 = arith.addf %42, %44 : vector<1x128xf32>
    %46 = arith.negf %45 : vector<1x128xf32>
    %47 = math.exp %46 : vector<1x128xf32>
    %cst_16 = arith.constant 1.000000e+00 : f32
    %48 = vector.broadcast %cst_16 : f32 to vector<1x128xf32>
    %49 = arith.addf %48, %47 : vector<1x128xf32>
    %50 = arith.divf %48, %49 : vector<1x128xf32>
    %c0_17 = arith.constant 0 : index
    %c0_18 = arith.constant 0 : index
    %51 = vector.load %arg8[%c0_17, %c0_18] : memref<1x128xf32, #tpu.memory_space<vmem>>, vector<1x128xf32>
    tpu.vector_store %arg8[%c0_17, %c0_18], %50 {strides = array<i32>} : memref<1x128xf32, #tpu.memory_space<vmem>>, vector<1x128xf32>,
    return
  }
  func.func @transform_0(%arg0: i32) -> (i32, i32) {
    %c0_i32 = arith.constant 0 : i32
    %c0_i32_0 = arith.constant 0 : i32
    return %c0_i32, %arg0 : i32, i32
  }
  func.func @transform_1(%arg0: i32) -> (i32, i32) {
    %c0_i32 = arith.constant 0 : i32
    %c0_i32_0 = arith.constant 0 : i32
    %c0_i32_1 = arith.constant 0 : i32
    return %c0_i32, %c0_i32_0 : i32, i32
  }
  func.func @transform_2(%arg0: i32) -> (i32, i32) {
    %c0_i32 = arith.constant 0 : i32
    %c0_i32_0 = arith.constant 0 : i32
    %c0_i32_1 = arith.constant 0 : i32
    return %c0_i32, %c0_i32_0 : i32, i32
  }
  func.func @transform_3(%arg0: i32) -> (i32, i32) {
    %c0_i32 = arith.constant 0 : i32
    %c0_i32_0 = arith.constant 0 : i32
    %c0_i32_1 = arith.constant 0 : i32
    return %c0_i32, %c0_i32_0 : i32, i32
  }
  func.func @transform_4(%arg0: i32) -> (i32, i32) {
    %c0_i32 = arith.constant 0 : i32
    %c0_i32_0 = arith.constant 0 : i32
    %c0_i32_1 = arith.constant 0 : i32
    return %c0_i32, %c0_i32_0 : i32, i32
  }
  func.func @transform_5(%arg0: i32) -> (i32, i32) {
    %c0_i32 = arith.constant 0 : i32
    %c0_i32_0 = arith.constant 0 : i32
    %c0_i32_1 = arith.constant 0 : i32
    return %c0_i32, %c0_i32_0 : i32, i32
  }
  func.func @transform_6(%arg0: i32) -> (i32, i32) {
    %c0_i32 = arith.constant 0 : i32
    %c0_i32_0 = arith.constant 0 : i32
    %c0_i32_1 = arith.constant 0 : i32
    return %c0_i32, %c0_i32_0 : i32, i32
  }
  func.func @transform_7(%arg0: i32) -> (i32, i32) {
    %c0_i32 = arith.constant 0 : i32
    %c0_i32_0 = arith.constant 0 : i32
    return %c0_i32, %arg0 : i32, i32
  }
}

</mosaic_0001>

<llo_original>
// kernel: policy_net_forward_fm.1
$region0: #{policy_net_forward_fm.1}
  #allocation0 [shape = 'u32[]', space=smem, size = 0x4, offset = 0x4, fixed_abs, tag = 'smem constant byte address 0x4 - core index']
  #allocation1 [shape = 'u32[144,128]{1,0:T(1,128)}', space=vmem, size = 0x12000, scoped, tag = 'internal scratch']
  #allocation2 [shape = 'f32[1,1]{1,0:T(1,128)S(1)}', space=vmem, size = 0x200, scoped, tag = 'scoped memory for policy_net_forward_fm.1']
  %s0 = inlined_call_operand.vmem [shape: f32[4,128], index: 0, kind: input, shape index: {}]
  %s1 = inlined_call_operand.vmem [shape: f32[24,4], index: 1, kind: input, shape index: {}]
  %s2 = inlined_call_operand.vmem [shape: f32[24,1], index: 2, kind: input, shape index: {}]
  %s3 = inlined_call_operand.vmem [shape: bf16[36,24], index: 3, kind: input, shape index: {}]
  %s4 = inlined_call_operand.vmem [shape: f32[36,1], index: 4, kind: input, shape index: {}]
  %s5 = inlined_call_operand.vmem [shape: f32[36,1], index: 5, kind: input, shape index: {}]
  %s6 = inlined_call_operand.<no memory space> [shape: f32[1,1], index: 6, kind: input, shape index: {}]
  %s7 = inlined_call_operand.hbm [shape: f32[1,128], index: 7, kind: output, shape index: {}]
  %s8 = sld [smem:[#allocation0]]
  $region38: #{policy_net_forward_fm.1} parent=0
    _
  %s10 = ssub.s32 1, %s8
  %s11 = scalar_select 0, %s10, %s8
  %v12 = vstv %s6
  %13 = vst [vmem:[#allocation2] sm:$0x1] %v12
  $region1: #{policy_net_forward_fm.1} parent=0
    #allocation3 [shape = 'u8[512]{0}', space=vmem, size = 0x400, scoped, tag = 'output window, operand 0, single buffered']
    #allocation4 [shape = 's32[1]{0}', space=sflag, size = 0x4, scoped, tag = 'scoped memory for policy_net_forward_fm.1']
    %14 = vsyncpa [#allocation4], 0
    // Predicated region
    $region2: #{policy_net_forward_fm.1} parent=1 // pred_check
      _
    $region3: #{policy_net_forward_fm.1} parent=1 // pred_check_branch
      %16 = sbr.rel (0) target = $region5
    $region4: #{policy_net_forward_fm.1} parent=1 // pred_region
      _
    $region5: #{policy_net_forward_fm.1} parent=1 // pred_fallthru
      _
    // Predicated region
    $region6: #{policy_net_forward_fm.1} parent=1 // pred_check
      _
    $region7: #{policy_net_forward_fm.1} parent=1 // pred_check_branch
      %18 = sbr.rel (0) target = $region9
    $region8: #{policy_net_forward_fm.1} parent=1 // pred_region
      _
    $region9: #{policy_net_forward_fm.1} parent=1 // pred_fallthru
      _
    // Predicated region
    $region10: #{policy_net_forward_fm.1} parent=1 // pred_check
      _
    $region11: #{policy_net_forward_fm.1} parent=1 // pred_check_branch
      %20 = sbr.rel (0) target = $region13
    $region12: #{policy_net_forward_fm.1} parent=1 // pred_region
      _
    $region13: #{policy_net_forward_fm.1} parent=1 // pred_fallthru
      _
    // Predicated region
    $region14: #{policy_net_forward_fm.1} parent=1 // pred_check
      _
    $region15: #{policy_net_forward_fm.1} parent=1 // pred_check_branch
      %22 = sbr.rel (0) target = $region17
    $region16: #{policy_net_forward_fm.1} parent=1 // pred_region
      _
    $region17: #{policy_net_forward_fm.1} parent=1 // pred_fallthru
      _
    // Predicated region
    $region18: #{policy_net_forward_fm.1} parent=1 // pred_check
      _
    $region19: #{policy_net_forward_fm.1} parent=1 // pred_check_branch
      %24 = sbr.rel (0) target = $region21
    $region20: #{policy_net_forward_fm.1} parent=1 // pred_region
      _
    $region21: #{policy_net_forward_fm.1} parent=1 // pred_fallthru
      _
    // Predicated region
    $region22: #{policy_net_forward_fm.1} parent=1 // pred_check
      _
    $region23: #{policy_net_forward_fm.1} parent=1 // pred_check_branch
      %26 = sbr.rel (0) target = $region25
    $region24: #{policy_net_forward_fm.1} parent=1 // pred_region
      _
    $region25: #{policy_net_forward_fm.1} parent=1 // pred_fallthru
      _
    // Predicated region
    $region26: #{policy_net_forward_fm.1} parent=1 // pred_check
      _
    $region27: #{policy_net_forward_fm.1} parent=1 // pred_check_branch
      %28 = sbr.rel (0) target = $region29
    $region28: #{policy_net_forward_fm.1} parent=1 // pred_region
      _
    $region29: #{policy_net_forward_fm.1} parent=1 // pred_fallthru
      _
    %v30 = vld [vmem:[%s0] sm:$0xf]
    %v31 = vld [vmem:[%s1] sm:$0xff]
    %v32 = vld [vmem:[%s1 + $0x8] sm:$0xff]
    %v33 = vld [vmem:[%s1 + $0x10] sm:$0xff]
    %35 = vset.pattern.permute.xlu0 0
    %36 = vperm.xlu0 %35, %v31
    %v37 = vpop.permute.xlu0 %36
    %40 = vset.pattern.permute.xlu0 0
    %41 = vperm.xlu0 %40, %v32
    %v42 = vpop.permute.xlu0 %41
    %45 = vset.pattern.permute.xlu0 0
    %46 = vperm.xlu0 %45, %v33
    %v47 = vpop.permute.xlu0 %46
    %v49 = vlaneseq
    %v50 = vshrl.u32 %v49, 7
    %v51 = vsub.s32 0, %v50
    %v52 = vrot.slane %v30, %v51
    %v53 = vmul.f32 %v37, %v52
    %v54 = vmul.f32 %v42, %v52
    %v55 = vmul.f32 %v47, %v52
    %56 = vset.pattern.permute.xlu0 1
    %57 = vperm.xlu0 %56, %v31
    %v58 = vpop.permute.xlu0 %57
    %60 = vset.pattern.permute.xlu0 1
    %61 = vperm.xlu0 %60, %v32
    %v62 = vpop.permute.xlu0 %61
    %64 = vset.pattern.permute.xlu0 1
    %65 = vperm.xlu0 %64, %v33
    %v66 = vpop.permute.xlu0 %65
    %v68 = vlaneseq
    %v69 = vshrl.u32 %v68, 7
    %v70 = vsub.s32 1, %v69
    %v71 = vrot.slane %v30, %v70
    %v72 = vmul.f32 %v58, %v71
    %v73 = vmul.f32 %v62, %v71
    %v74 = vmul.f32 %v66, %v71
    %v75 = vadd.f32 %v53, %v72
    %v76 = vadd.f32 %v54, %v73
    %v77 = vadd.f32 %v55, %v74
    %78 = vset.pattern.permute.xlu0 2
    %79 = vperm.xlu0 %78, %v31
    %v80 = vpop.permute.xlu0 %79
    %82 = vset.pattern.permute.xlu0 2
    %83 = vperm.xlu0 %82, %v32
    %v84 = vpop.permute.xlu0 %83
    %86 = vset.pattern.permute.xlu0 2
    %87 = vperm.xlu0 %86, %v33
    %v88 = vpop.permute.xlu0 %87
    %v90 = vlaneseq
    %v91 = vshrl.u32 %v90, 7
    %v92 = vsub.s32 2, %v91
    %v93 = vrot.slane %v30, %v92
    %v94 = vmul.f32 %v80, %v93
    %v95 = vmul.f32 %v84, %v93
    %v96 = vmul.f32 %v88, %v93
    %v97 = vadd.f32 %v75, %v94
    %v98 = vadd.f32 %v76, %v95
    %v99 = vadd.f32 %v77, %v96
    %100 = vset.pattern.permute.xlu0 3
    %101 = vperm.xlu0 %100, %v31
    %v102 = vpop.permute.xlu0 %101
    %104 = vset.pattern.permute.xlu0 3
    %105 = vperm.xlu0 %104, %v32
    %v106 = vpop.permute.xlu0 %105
    %108 = vset.pattern.permute.xlu0 3
    %109 = vperm.xlu0 %108, %v33
    %v110 = vpop.permute.xlu0 %109
    %v112 = vlaneseq
    %v113 = vshrl.u32 %v112, 7
    %v114 = vsub.s32 3, %v113
    %v115 = vrot.slane %v30, %v114
    %v116 = vmul.f32 %v102, %v115
    %v117 = vmul.f32 %v106, %v115
    %v118 = vmul.f32 %v110, %v115
    %v119 = vadd.f32 %v97, %v116
    %v120 = vadd.f32 %v98, %v117
    %v121 = vadd.f32 %v99, %v118
    %v122 = vld [vmem:[%s2] sm:$0xff]
    %v123 = vld [vmem:[%s2 + $0x8] sm:$0xff]
    %v124 = vld [vmem:[%s2 + $0x10] sm:$0xff]
    %126 = vset.pattern.permute.xlu0 0
    %127 = vperm.xlu0 %126, %v122
    %v128 = vpop.permute.xlu0 %127
    %131 = vset.pattern.permute.xlu0 0
    %132 = vperm.xlu0 %131, %v123
    %v133 = vpop.permute.xlu0 %132
    %136 = vset.pattern.permute.xlu0 0
    %137 = vperm.xlu0 %136, %v124
    %v138 = vpop.permute.xlu0 %137
    %v140 = vadd.f32 %v119, %v128
    %v141 = vadd.f32 %v120, %v133
    %v142 = vadd.f32 %v121, %v138
    %v143 = vmax.f32 %v140, 0.0
    %v144 = vmax.f32 %v141, 0.0
    %v145 = vmax.f32 %v142, 0.0
    %v146 = vld [vmem:[%s3] sm:$0xf]
    %v147 = vld [vmem:[%s3 + $0x4] sm:$0xf]
    %v148 = vld [vmem:[%s3 + $0x8] sm:$0xf]
    %v149 = vld [vmem:[%s3 + $0xc] sm:$0xf]
    %v150 = vld [vmem:[%s3 + $0x10] sm:$0x3]
    %v151 = vpack.c.bf16 %v144, %v143
    %v152 = vpack.c.bf16 %v145, %v145
    %v153 = vld [vmem:[%s4] sm:$0xff]
    %v154 = vld [vmem:[%s4 + $0x8] sm:$0xff]
    %v155 = vld [vmem:[%s4 + $0x10] sm:$0xff]
    %v156 = vld [vmem:[%s4 + $0x18] sm:$0xff]
    %v157 = vld [vmem:[%s4 + $0x20] sm:$0xf]
    %159 = vset.pattern.permute.xlu0 0
    %160 = vperm.xlu0 %159, %v153
    %v161 = vpop.permute.xlu0 %160
    %164 = vset.pattern.permute.xlu0 0
    %165 = vperm.xlu0 %164, %v154
    %v166 = vpop.permute.xlu0 %165
    %169 = vset.pattern.permute.xlu0 0
    %170 = vperm.xlu0 %169, %v155
    %v171 = vpop.permute.xlu0 %170
    %174 = vset.pattern.permute.xlu0 0
    %175 = vperm.xlu0 %174, %v156
    %v176 = vpop.permute.xlu0 %175
    %179 = vset.pattern.permute.xlu0 0
    %180 = vperm.xlu0 %179, %v157
    %v181 = vpop.permute.xlu0 %180
    %v188 = vunpack.c.l.b16 %v146
    %v189 = vunpack.c.l.b16 %v147
    %v190 = vunpack.c.l.b16 %v148
    %v191 = vunpack.c.l.b16 %v149
    %v192 = vunpack.c.l.b16 %v150
    %v193 = vpack.c.b16 %v189, %v188
    %v194 = vpack.c.b16 %v191, %v190
    %v195 = vpack.c.b16 %v192, %v192
    %vm196 = vcmask 195584
    %v198 = vsel %vm196, %v193, 0
    %v201 = vsel %vm196, %v194, 0
    %v204 = vsel %vm196, %v195, 0
    %vm206 = vcmask 1043456
    %v208 = vsel %vm206, %v152, 0
    %210 = vmatprep.subr.bf16.mxu0 0
    %211 = vmatpush1.bf16.msra.mxu0 %v151
    %212 = vmatprep.subr.bf16.mxu0 0
    %213 = vmatpush1.bf16.msra.mxu0 %v208
    %214 = vmatprep.subr.bf16.mxu0 0
    %215 = vmatpush1.bf16.msra.mxu0 0
    %216 = vmatprep.subr.bf16.mxu0 0
    %217 = vmatpush1.bf16.msra.mxu0 0
    %218 = vmatprep.subr.bf16.mxu0 0
    %219 = vmatpush1.bf16.msra.mxu0 0
    %220 = vmatprep.subr.bf16.mxu0 0
    %221 = vmatpush1.bf16.msra.mxu0 0
    %222 = vmatprep.subr.bf16.mxu0 0
    %223 = vmatpush1.bf16.msra.mxu0 0
    %224 = vmatprep.subr.bf16.mxu0 0
    %225 = vmatpush1.bf16.msra.mxu0 0
    %226 = vmatprep.subr.bf16.mxu0 0
    %227 = vmatpush1.bf16.msra.mxu0 0
    %228 = vmatprep.subr.bf16.mxu0 0
    %229 = vmatpush1.bf16.msra.mxu0 0
    %230 = vmatprep.subr.bf16.mxu0 0
    %231 = vmatpush1.bf16.msra.mxu0 0
    %232 = vmatprep.subr.bf16.mxu0 0
    %233 = vmatpush1.bf16.msra.mxu0 0
    %234 = vmatprep.subr.bf16.mxu0 0
    %235 = vmatpush1.bf16.msra.mxu0 0
    %236 = vmatprep.subr.bf16.mxu0 0
    %237 = vmatpush1.bf16.msra.mxu0 0
    %238 = vmatprep.subr.bf16.mxu0 0
    %239 = vmatpush1.bf16.msra.mxu0 0
    %240 = vmatprep.subr.bf16.mxu0 0
    %241 = vmatpush1.bf16.msra.mxu0 0
    %242 = vmatprep.mubr.bf16.mxu0 0
    %243 = vmatmul.mubr.bf16.gmra.mrb[0].mxu0 %v198
    %v244 = vpop.f32.mrb[0].mxu0
    %v245 = vadd.f32 %v161, %v244
    %v246 = vpop.f32.mrb[0].mxu0
    %v247 = vpop.f32.mrb[0].mxu0
    %v248 = vadd.f32 %v166, %v247
    %v249 = vpop.f32.mrb[0].mxu0
    %250 = vmatprep.mubr.bf16.mxu0 0
    %251 = vmatmul.mubr.bf16.gmra.mrb[0].mxu0 %v201
    %v252 = vpop.f32.mrb[0].mxu0
    %v253 = vadd.f32 %v171, %v252
    %v254 = vpop.f32.mrb[0].mxu0
    %v255 = vpop.f32.mrb[0].mxu0
    %v256 = vadd.f32 %v176, %v255
    %v257 = vpop.f32.mrb[0].mxu0
    %258 = vmatprep.mubr.bf16.mxu0 0
    %259 = vmatmul.mubr.bf16.gmra.mrb[0].mxu0 %v204
    %v260 = vpop.f32.mrb[0].mxu0
    %v261 = vadd.f32 %v181, %v260
    %v262 = vpop.f32.mrb[0].mxu0
    %v263 = vpop.f32.mrb[0].mxu0
    %v264 = vpop.f32.mrb[0].mxu0
    %265 = vdwg.mxu0
    %v266 = vmax.f32 %v245, 0.0
    %v267 = vmax.f32 %v248, 0.0
    %v268 = vmax.f32 %v253, 0.0
    %v269 = vmax.f32 %v256, 0.0
    %v270 = vmax.f32 %v261, 0.0
    %v271 = vld [vmem:[%s5] sm:$0xff]
    %v272 = vld [vmem:[%s5 + $0x8] sm:$0xff]
    %v273 = vld [vmem:[%s5 + $0x10] sm:$0xff]
    %v274 = vld [vmem:[%s5 + $0x18] sm:$0xff]
    %v275 = vld [vmem:[%s5 + $0x20] sm:$0xf]
    %277 = vset.pattern.permute.xlu0 0
    %278 = vperm.xlu0 %277, %v271
    %v279 = vpop.permute.xlu0 %278
    %282 = vset.pattern.permute.xlu0 0
    %283 = vperm.xlu0 %282, %v272
    %v284 = vpop.permute.xlu0 %283
    %287 = vset.pattern.permute.xlu0 0
    %288 = vperm.xlu0 %287, %v273
    %v289 = vpop.permute.xlu0 %288
    %292 = vset.pattern.permute.xlu0 0
    %293 = vperm.xlu0 %292, %v274
    %v294 = vpop.permute.xlu0 %293
    %297 = vset.pattern.permute.xlu0 0
    %298 = vperm.xlu0 %297, %v275
    %v299 = vpop.permute.xlu0 %298
    %v301 = vmul.f32 %v266, %v279
    %v302 = vmul.f32 %v267, %v284
    %v303 = vmul.f32 %v268, %v289
    %v304 = vmul.f32 %v269, %v294
    %v305 = vmul.f32 %v270, %v299
    %v306 = vadd.f32 %v301, %v302
    %v307 = vadd.f32 %v306, %v303
    %v308 = vadd.f32 %v307, %v304
    %v309 = vsel %vm206, %v305, 0.0
    %v310 = vadd.f32 %v308, %v309
    %v311 = vrot.slane %v310, 4
    %v312 = vadd.f32 %v310, %v311
    %v313 = vrot.slane %v312, 2
    %v314 = vadd.f32 %v312, %v313
    %v315 = vrot.slane %v314, 1
    %v316 = vadd.f32 %v314, %v315
    %v317 = vld [vmem:[#allocation2] sm:$0x1]
    %319 = vset.pattern.permute.xlu0 0
    %320 = vperm.xlu0 %319, %v317
    %v321 = vpop.permute.xlu0 %320
    %v323 = vlaneseq
    %v324 = vshrl.u32 %v323, 7
    %v325 = vsub.s32 0, %v324
    %v326 = vrot.slane %v321, %v325
    %v327 = vadd.f32 %v316, %v326
    %v328 = vxor.u32 %v327, 2147483648
    %v329 = vmul.f32 %v328, 1.442695
    %v330 = vpow.pop %v329
    %v331 = vadd.f32 %v330, 1.0
    %v332 = vrcp.pop %v331
    %v333 = vmul.f32 1.0, %v332
    %334 = vst [vmem:[#allocation3] sm:$0x1] %v333
    // Predicated region
    $region30: #{policy_net_forward_fm.1} parent=1 // pred_check
      _
    $region31: #{policy_net_forward_fm.1} parent=1 // pred_check_branch
      %336 = sbr.rel (0) target = $region33
    $region32: #{policy_net_forward_fm.1} parent=1 // pred_region
      %s338 = ssub.s32 16, 16
      %339 = vsyncadd [#allocation4], %s338
      %s341 = sshll.u32 [#allocation3], 4
      %s342 = int_to_ptr.vmem [resolvable:$true] %s341
      %344 = dma.vmem_to_hbm [thread:$0]  %s342, 16, %s7, [#allocation4]
    $region33: #{policy_net_forward_fm.1} parent=1 // pred_fallthru
      _
    // Predicated region
    $region34: #{policy_net_forward_fm.1} parent=1 // pred_check
      _
    $region35: #{policy_net_forward_fm.1} parent=1 // pred_check_branch
      %346 = sbr.rel (0) target = $region37
    $region36: #{policy_net_forward_fm.1} parent=1 // pred_region
      %347 = dma.done [#allocation4], 16
    $region37: #{policy_net_forward_fm.1} parent=1 // pred_fallthru
      _
    %348 = vsyncpa [#allocation4], 1

</llo_original>
